<compile_context>
chip_gen: v7x
topology: tpu7x:2x2x1
jax: 0.10.0
libtpu: 0.0.40
codegen_flags: <defaults>
</compile_context>

<pallas_src>
import math
from functools import partial

import jax
import jax.numpy as jnp
from jax.experimental import pallas as pl
from jax.experimental.pallas import tpu as pltpu


# ---------------------------------------------------------------------------
# Prep pass: row-wise L2 normalization + cast (one-shot, memory-bound).
# ---------------------------------------------------------------------------
def _rownorm_kernel(a_ref, o_ref):
    a = a_ref[...].astype(jnp.float32)
    # 1 / max(||row||_2, 1e-12)   (matches torch.nn.functional.normalize)
    inv = jax.lax.rsqrt(jnp.maximum(jnp.sum(a * a, axis=1, keepdims=True), 1e-24))
    o_ref[...] = (a * inv).astype(o_ref.dtype)


def _l2_normalize_rows(a, out_dtype, block_r=512):
    """Row-normalize an (R, D) matrix and cast to out_dtype in one Pallas pass."""
    R, D = a.shape
    tr = R if R <= block_r else block_r
    return pl.pallas_call(
        _rownorm_kernel,
        out_shape=jax.ShapeDtypeStruct((R, D), out_dtype),
        grid=(pl.cdiv(R, tr),),
        in_specs=[pl.BlockSpec((tr, D), lambda i: (i, 0))],
        out_specs=pl.BlockSpec((tr, D), lambda i: (i, 0)),
        compiler_params=pltpu.CompilerParams(dimension_semantics=("parallel",)),
    )(a)


# ---------------------------------------------------------------------------
# Main kernels: tiled cosine similarity (+ optional angular-margin epilogue).
# Inputs are already L2-normalized and cast to the matmul dtype; W is (D, C).
# ---------------------------------------------------------------------------
def _arcface_margin_kernel(xn_ref, wt_ref, lab_ref, hit_ref, o_ref, *,
                           s, cos_m, sin_m, eps, block_c):
    i = pl.program_id(0)          # batch tile
    j = pl.program_id(1)          # class tile

    cos = jax.lax.dot_general(
        xn_ref[...], wt_ref[...],
        dimension_numbers=(((1,), (0,)), ((), ())),
        preferred_element_type=jnp.float32)                        # (TB, TC) f32
    cos = jnp.clip(cos, -1.0 + eps, 1.0 - eps)

    tile_has_label = hit_ref[i, j] > 0          # scalar read from SMEM

    @pl.when(tile_has_label)
    def _():
        # Merged single select: (col == label) & (cos > 0) -> margin value.
        lab_local = lab_ref[...] - j * block_c                     # (TB, 1)
        col = jax.lax.broadcasted_iota(jnp.int32, cos.shape, 1)    # (TB, TC)
        sin = jnp.sqrt(1.0 - cos * cos)
        cos_margin = cos * cos_m - sin * sin_m
        sel = (col == lab_local) & (cos > 0.0)
        o_ref[...] = (s * jnp.where(sel, cos_margin, cos)).astype(o_ref.dtype)

    @pl.when(jnp.logical_not(tile_has_label))
    def _():
        o_ref[...] = (s * cos).astype(o_ref.dtype)


def _arcface_cos_kernel(xn_ref, wt_ref, o_ref, *, s, eps):
    cos = jax.lax.dot_general(
        xn_ref[...], wt_ref[...],
        dimension_numbers=(((1,), (0,)), ((), ())),
        preferred_element_type=jnp.float32)
    o_ref[...] = (s * jnp.clip(cos, -1.0 + eps, 1.0 - eps)).astype(o_ref.dtype)


# ---------------------------------------------------------------------------
# Wrapper
# ---------------------------------------------------------------------------
def arcface_forward(x, weight, label=None, *, s=30.0, m=0.5,
                    matmul_dtype=jnp.bfloat16, out_dtype=jnp.float32,
                    block_b=512, block_c=1024):
    """ArcFace forward pass.

    x:      (B, in_features) float features
    weight: (out_features, in_features) class weights
    label:  optional (B,) integer labels; None -> returns s * cos_theta
    Returns (B, out_features) logits in `out_dtype`.

    matmul_dtype=bf16 halves the dominant weight HBM stream; pass jnp.float32
    for bit-accurate cosines (the label-column branch tests cos_theta > 0,
    which bf16 rounding can flip when |cos_theta| is tiny).
    """
    B, D = x.shape
    C, Dw = weight.shape
    assert D == Dw, "feature dims of x and weight must match"
    assert block_b % 8 == 0 and block_c % 128 == 0
    eps = 1e-7

    # ---- one-shot prep (hoisted out of the main grid) -----------------------
    xn = _l2_normalize_rows(x, matmul_dtype)                  # (B, D)
    wn = _l2_normalize_rows(weight, matmul_dtype)             # (C, D)
    wn_t = jnp.transpose(wn)                                  # (D, C): layout plumbing

    tb = B if B <= block_b else block_b
    tc = C if C <= block_c else block_c
    nbi, nbj = pl.cdiv(B, tb), pl.cdiv(C, tc)
    grid = (nbi, nbj)

    # VMEM budget; only override the default scoped limit when actually needed.
    isz = jnp.dtype(matmul_dtype).itemsize
    osz = jnp.dtype(out_dtype).itemsize
    vmem_est = 2 * (tb * D + D * tc) * isz + 2 * tb * tc * osz
    vmem_limit = None
    if vmem_est > (12 << 20):                    # above v5e's 16 MiB default scoped VMEM
        vmem_limit = min(int(1.5 * vmem_est) + (2 << 20), 64 << 20)   # v7x physical cap

    compiler_params = pltpu.CompilerParams(
        # No cross-iteration state -> both axes independent; megacore may shard
        # either axis (class-parallel halves chip-level W reads on v7x).
        dimension_semantics=("parallel", "parallel"),
        vmem_limit_bytes=vmem_limit)

    x_spec = pl.BlockSpec((tb, D), lambda i, j: (i, 0))
    w_spec = pl.BlockSpec((D, tc), lambda i, j: (0, j))
    o_spec = pl.BlockSpec((tb, tc), lambda i, j: (i, j))
    out_shape = jax.ShapeDtypeStruct((B, C), out_dtype)

    if label is None:
        # Inference specialization: no margin epilogue at all.
        kernel = partial(_arcface_cos_kernel, s=float(s), eps=eps)
        return pl.pallas_call(
            kernel, out_shape=out_shape, grid=grid,
            in_specs=[x_spec, w_spec], out_specs=o_spec,
            compiler_params=compiler_params,
        )(xn, wn_t)

    label_arr = label.astype(jnp.int32).reshape(B, 1)
    # Per-(batch-tile, class-tile) "contains a label column" bits (O(B) work),
    # read from SMEM in the kernel to skip the margin epilogue on miss tiles.
    hit = jnp.zeros((nbi, nbj), jnp.int32).at[
        jnp.arange(B, dtype=jnp.int32) // tb, label_arr[:, 0] // tc].add(1)

    kernel = partial(_arcface_margin_kernel, s=float(s),
                     cos_m=float(math.cos(m)), sin_m=float(math.sin(m)),
                     eps=eps, block_c=tc)
    return pl.pallas_call(
        kernel, out_shape=out_shape, grid=grid,
        in_specs=[
            x_spec, w_spec,
            pl.BlockSpec((tb, 1), lambda i, j: (i, 0)),               # labels (VMEM)
            pl.BlockSpec(memory_space=pltpu.MemorySpace.SMEM),        # hit table
        ],
        out_specs=o_spec,
        compiler_params=compiler_params,
    )(xn, wn_t, label_arr, hit)


# ----------------------------- test / demo ----------------------------------
def _arcface_ref(x, w, label, s=30.0, m=0.5):
    xn = x / jnp.maximum(jnp.linalg.norm(x, axis=1, keepdims=True), 1e-12)
    wn = w / jnp.maximum(jnp.linalg.norm(w, axis=1, keepdims=True), 1e-12)
    cos = jnp.clip(xn @ wn.T, -1.0 + 1e-7, 1.0 - 1e-7)
    if label is None:
        return s * cos
    oh = jax.nn.one_hot(label, w.shape[0], dtype=jnp.float32)
    sin = jnp.sqrt(1.0 - cos * cos)
    cm = cos * math.cos(m) - sin * math.sin(m)
    cm = jnp.where(cos > 0, cm, cos)
    return s * (oh * cm + (1.0 - oh) * cos)


def _xavier_uniform(key, shape):
    fan_out, fan_in = shape
    bound = math.sqrt(6.0 / (fan_in + fan_out))
    return jax.random.uniform(key, shape, jnp.float32, -bound, bound)


if __name__ == "__main__":
    key = jax.random.PRNGKey(0)
    k_x, k_w, k_l, k2_x, k2_w, k2_l = jax.random.split(key, 6)

    # --- case 1: small shapes, single tile, exact f32 path -------------------
    B, D, C = 8, 32, 16
    x = jax.random.normal(k_x, (B, D), jnp.float32)
    w = _xavier_uniform(k_w, (C, D))
    label = jax.random.randint(k_l, (B,), 0, C, jnp.int32)

    logits_train = arcface_forward(x, w, label, matmul_dtype=jnp.float32)
    logits_eval = arcface_forward(x, w, None, matmul_dtype=jnp.float32)
    jax.block_until_ready((logits_train, logits_eval))
    assert jnp.allclose(logits_train, _arcface_ref(x, w, label), atol=1e-3)
    assert jnp.allclose(logits_eval, _arcface_ref(x, w, None), atol=1e-3)

    # Default fast path (bf16 MXU operands, f32 accumulation): loose check on
    # the non-label columns (the margin branch is sensitive to cos rounding).
    logits_bf16 = arcface_forward(x, w, label)
    jax.block_until_ready(logits_bf16)
    off = jax.nn.one_hot(label, C, dtype=jnp.float32) == 0
    assert jnp.allclose(jnp.where(off, logits_bf16, 0.0),
                        jnp.where(off, _arcface_ref(x, w, label), 0.0),
                        atol=0.25)

    # --- case 2: multi-tile grid (2 batch tiles x 3 class tiles, ragged C) ---
    B2, D2, C2 = 16, 64, 320
    x2 = jax.random.normal(k2_x, (B2, D2), jnp.float32)
    w2 = _xavier_uniform(k2_w, (C2, D2))
    label2 = jax.random.randint(k2_l, (B2,), 0, C2, jnp.int32)

    logits2 = arcface_forward(x2, w2, label2, matmul_dtype=jnp.float32,
                              block_b=8, block_c=128)
    logits2_eval = arcface_forward(x2, w2, None, matmul_dtype=jnp.float32,
                                   block_b=8, block_c=128)
    jax.block_until_ready((logits2, logits2_eval))
    assert jnp.allclose(logits2, _arcface_ref(x2, w2, label2), atol=1e-3)
    assert jnp.allclose(logits2_eval, _arcface_ref(x2, w2, None), atol=1e-3)

    print("KERNEL_OK")
</pallas_src>

<mosaic_0001>
module attributes {stable_mosaic.version = 11 : i64} {
  func.func @_rownorm_kernel(%arg0: i32, %arg1: memref<8x32xf32, #tpu.memory_space<vmem>>, %arg2: memref<8x32xf32, #tpu.memory_space<vmem>>) attributes {dimension_semantics = [#tpu.dimension_semantics<parallel>], iteration_bounds = array<i64: 1>, scalar_prefetch = 0 : i64, scratch_operands = 0 : i64, tpu.core_type = #tpu.core_type<tc>, window_params = [{transform_indices = @transform_0, window_bounds = array<i64: 8, 32>}, {transform_indices = @transform_1, window_bounds = array<i64: 8, 32>}]} {
    %c0 = arith.constant 0 : index
    %c0_0 = arith.constant 0 : index
    %0 = vector.load %arg1[%c0, %c0_0] : memref<8x32xf32, #tpu.memory_space<vmem>>, vector<8x32xf32>
    %1 = arith.mulf %0, %0 : vector<8x32xf32>
    %cst = arith.constant dense<0.000000e+00> : vector<8xf32>
    %2 = vector.multi_reduction <add>, %1, %cst [1] : vector<8x32xf32> to vector<8xf32>
    %3 = vector.shape_cast %2 : vector<8xf32> to vector<8x1xf32>
    %cst_1 = arith.constant 1.000000e-24 : f32
    %4 = vector.broadcast %cst_1 : f32 to vector<8x1xf32>
    %5 = arith.maximumf %3, %4 : vector<8x1xf32>
    %6 = math.rsqrt %5 : vector<8x1xf32>
    %7 = vector.broadcast %6 : vector<8x1xf32> to vector<8x32xf32>
    %8 = arith.mulf %0, %7 : vector<8x32xf32>
    %c0_2 = arith.constant 0 : index
    %c0_3 = arith.constant 0 : index
    %9 = vector.load %arg2[%c0_2, %c0_3] : memref<8x32xf32, #tpu.memory_space<vmem>>, vector<8x32xf32>
    tpu.vector_store %arg2[%c0_2, %c0_3], %8 {strides = array<i32>} : memref<8x32xf32, #tpu.memory_space<vmem>>, vector<8x32xf32>,
    return
  }
  func.func @transform_0(%arg0: i32) -> (i32, i32) {
    %c0_i32 = arith.constant 0 : i32
    %c0_i32_0 = arith.constant 0 : i32
    return %arg0, %c0_i32 : i32, i32
  }
  func.func @transform_1(%arg0: i32) -> (i32, i32) {
    %c0_i32 = arith.constant 0 : i32
    %c0_i32_0 = arith.constant 0 : i32
    return %arg0, %c0_i32 : i32, i32
  }
}

</mosaic_0001>

<llo_original>
// kernel: tpu_custom_call.1
$region0: #{tpu_custom_call.1}
  #allocation0 [shape = 'u32[]', space=smem, size = 0x4, offset = 0x4, fixed_abs, tag = 'smem constant byte address 0x4 - core index']
  #allocation1 [shape = 'u32[144,128]{1,0:T(1,128)}', space=vmem, size = 0x12000, scoped, tag = 'internal scratch']
  %s0 = inlined_call_operand.hbm [shape: f32[8,32], index: 0, kind: input, shape index: {}]
  %s1 = inlined_call_operand.hbm [shape: f32[8,32], index: 1, kind: output, shape index: {}]
  %s2 = sld [smem:[#allocation0]]
  $region18: #{tpu_custom_call.1} parent=0
    _
  %s4 = ssub.s32 1, %s2
  %s5 = scalar_select 0, %s4, %s2
  $region1: #{tpu_custom_call.1} parent=0
    #allocation2 [shape = 'u8[4096]{0}', space=vmem, size = 0x1000, scoped, tag = 'input window, operand 0, single buffered']
    #allocation3 [shape = 's32[1]{0}', space=sflag, size = 0x4, scoped, tag = 'scoped memory for tpu_custom_call.1']
    #allocation4 [shape = 's32[1]{0}', space=sflag, size = 0x4, scoped, tag = 'scoped memory for tpu_custom_call.1']
    #allocation5 [shape = 'u8[4096]{0}', space=vmem, size = 0x1000, scoped, tag = 'output window, operand 0, single buffered']
    %6 = vsyncpa [#allocation3], 0
    %7 = vsyncpa [#allocation4], 0
    // Predicated region
    $region2: #{tpu_custom_call.1} parent=1 // pred_check
      _
    $region3: #{tpu_custom_call.1} parent=1 // pred_check_branch
      %9 = sbr.rel (0) target = $region5
    $region4: #{tpu_custom_call.1} parent=1 // pred_region
      %s11 = ssub.s32 128, 128
      %12 = vsyncadd [#allocation3], %s11
      %s14 = sshll.u32 [#allocation2], 4
      %s15 = int_to_ptr.vmem [resolvable:$true] %s14
      %17 = dma.hbm_to_vmem [thread:$0]  %s0, 128, %s15, [#allocation3]
    $region5: #{tpu_custom_call.1} parent=1 // pred_fallthru
      _
    // Predicated region
    $region6: #{tpu_custom_call.1} parent=1 // pred_check
      _
    $region7: #{tpu_custom_call.1} parent=1 // pred_check_branch
      %19 = sbr.rel (0) target = $region9
    $region8: #{tpu_custom_call.1} parent=1 // pred_region
      %20 = dma.done [#allocation3], 128
    $region9: #{tpu_custom_call.1} parent=1 // pred_fallthru
      _
    %v21 = vld [vmem:[#allocation2] sm:$0xff]
    %v22 = vmul.f32 %v21, %v21
    %vm23 = vcmask 261120
    %v24 = vsel %vm23, %v22, 0.0
    %25 = vadd.xlane.f32.xlu0 %v24
    %v26 = vpop.xlane.xlu0 %25
    %v27 = vmax.f32 %v26, 1e-24
    %v28 = vrsqrt.pop %v27
    %v29 = vmul.f32 %v21, %v28
    %30 = vst.msk [vmem:[#allocation5] sm:$0xff] %vm23, %v29
    // Predicated region
    $region10: #{tpu_custom_call.1} parent=1 // pred_check
      _
    $region11: #{tpu_custom_call.1} parent=1 // pred_check_branch
      %32 = sbr.rel (0) target = $region13
    $region12: #{tpu_custom_call.1} parent=1 // pred_region
      %s34 = ssub.s32 128, 128
      %35 = vsyncadd [#allocation4], %s34
      %s37 = sshll.u32 [#allocation5], 4
      %s38 = int_to_ptr.vmem [resolvable:$true] %s37
      %40 = dma.vmem_to_hbm [thread:$0]  %s38, 128, %s1, [#allocation4]
    $region13: #{tpu_custom_call.1} parent=1 // pred_fallthru
      _
    // Predicated region
    $region14: #{tpu_custom_call.1} parent=1 // pred_check
      _
    $region15: #{tpu_custom_call.1} parent=1 // pred_check_branch
      %42 = sbr.rel (0) target = $region17
    $region16: #{tpu_custom_call.1} parent=1 // pred_region
      %43 = dma.done [#allocation4], 128
    $region17: #{tpu_custom_call.1} parent=1 // pred_fallthru
      _
    %44 = vsyncpa [#allocation3], 1
    %45 = vsyncpa [#allocation4], 1

</llo_original>
